<compile_context>
chip_gen: v5e
topology: v5e:2x2
jax: 0.10.0
libtpu: 0.0.40
codegen_flags: <defaults>
</compile_context>

<pallas_src>
import functools

import jax
import jax.numpy as jnp
from jax import lax
from jax.experimental import pallas as pl
from jax.experimental.pallas import tpu as pltpu

COMPUTE_DTYPE = jnp.float32   # bf16 is a valid fast path on v6e/v7x (keep f32 on v5e VPU)
BIAS_ROWS = 8                 # sublane-aligned ones K-block used to fold per-channel biases
NB_MAX = 4                    # max images per grid step (keeps the patch value small)


def basic_block_kernel(mask_ref, x_ref, w1s_ref, w2b_ref, o_ref, *, H, W, cmid):
    """One block of Nb images per grid step, lane-dense (C, Nb*H*W) layout.

    mask_ref : (8, L)               precomputed edge masks for the 8 non-center taps
    x_ref    : (cp, L)              input slab, channels zero-padded to a multiple of 8
    w1s_ref  : (cmid+cout, 9*cp+8)  [conv1 | 1x1 shortcut] rows, BN scales + biases folded
    w2b_ref  : (cout, 9*cmid+8)     conv2 rows, BN2 scale + bias folded
    o_ref    : (cout, L)            output slab
    (L = Nb * H * W)
    """
    L = x_ref.shape[1]
    x = x_ref[...]                               # (cp, L)
    masks = mask_ref[...]                        # (8, L)
    ones_blk = jnp.ones((BIAS_ROWS, L), x.dtype) # bias K-block (weights put bias in col 0)

    def taps(v):
        """9 shifted tap slabs of v (tap order = (dy,dx) row-major), edge taps masked."""
        out, m = [], 0
        for dy in (-1, 0, 1):
            for dx in (-1, 0, 1):
                if dy == 0 and dx == 0:
                    out.append(v)
                else:
                    shift = (-(dy * W + dx)) % L      # value at p comes from p + dy*W + dx
                    out.append(pltpu.roll(v, shift, 1) * masks[m:m + 1, :])
                    m += 1
        return out

    # ---- matmul 1: conv1 (3x3, pad 1, BN1 folded)  +  1x1 shortcut (BNs folded) ----
    patch1 = jnp.concatenate(taps(x) + [ones_blk], axis=0)            # (9*cp+8, L)
    acc1 = jnp.dot(w1s_ref[...], patch1,
                   preferred_element_type=jnp.float32)                # (cmid+cout, L) f32
    h1 = jnp.maximum(acc1[:cmid, :], 0.0)                             # ReLU(BN1(conv1))
    sc = acc1[cmid:, :]                                               # BNs(conv1x1) shortcut

    # ---- matmul 2: conv2 (3x3, pad 1, BN2 folded) ----
    patch2 = jnp.concatenate(taps(h1.astype(x.dtype)) + [ones_blk], axis=0)  # (9*cmid+8, L)
    acc2 = jnp.dot(w2b_ref[...], patch2,
                   preferred_element_type=jnp.float32)                # (cout, L) f32

    # ---- residual add + final ReLU, unmasked lane-dense store ----
    o_ref[...] = jnp.maximum(acc2 + sc, 0.0)


def _fold_bn(gamma, beta, mean, var, eps=1e-5):
    scale = gamma / jnp.sqrt(var + eps)
    return scale, beta - mean * scale


def basic_block_forward(x_nchw, p, eps=1e-5):
    N, Cin, H, W = x_nchw.shape
    Cmid = p["w1"].shape[0]
    Cout = p["w2"].shape[0]
    HW = H * W
    Cp = ((Cin + 7) // 8) * 8          # sublane-align the input channel dim
    f32 = jnp.float32

    # ---- choose images-per-step Nb and grid length G (>= 2 steps for v7x megacore) ----
    if N >= 2:
        G = max(2, -(-N // NB_MAX))
    else:
        G = 1
    Nb = -(-N // G)
    G = -(-N // Nb)
    if N >= 2:
        G = max(G, 2)
    N_pad = G * Nb
    L = Nb * HW

    # ---- fold BN scales into conv weights; biases into an extra bias K-block column ----
    s1, b1 = _fold_bn(*p["bn1"], eps=eps)
    s2, b2 = _fold_bn(*p["bn2"], eps=eps)
    ss, bs = _fold_bn(*p["bns"], eps=eps)

    def bias_block(b):                                       # (M, BIAS_ROWS), bias in col 0
        return jnp.zeros((b.shape[0], BIAS_ROWS), f32).at[:, 0].set(b)

    # conv1 rows: im2col layout (col = (ky*3+kx)*Cp + ci), matching the kernel tap order
    w1f = p["w1"] * s1[:, None, None, None]                  # (Cmid, Cin, 3, 3)
    w1r = jnp.transpose(w1f, (0, 2, 3, 1))                   # (Cmid, 3, 3, Cin)
    w1r = jnp.pad(w1r, ((0, 0), (0, 0), (0, 0), (0, Cp - Cin)))
    w1_flat = w1r.reshape(Cmid, 9 * Cp)

    # 1x1 shortcut rows: only the center-tap (t=4) K block is nonzero
    wsf = p["ws"] * ss[:, None]                              # (Cout, Cin)
    ws9 = jnp.zeros((Cout, 9, Cp), f32).at[:, 4, :Cin].set(wsf)
    ws_flat = ws9.reshape(Cout, 9 * Cp)

    w1s = jnp.concatenate([
        jnp.concatenate([w1_flat, bias_block(b1)], axis=1),
        jnp.concatenate([ws_flat, bias_block(bs)], axis=1)], axis=0
    ).astype(COMPUTE_DTYPE)                                  # (Cmid+Cout, 9*Cp+8)

    w2f = p["w2"] * s2[:, None, None, None]                  # (Cout, Cmid, 3, 3)
    w2_flat = jnp.transpose(w2f, (0, 2, 3, 1)).reshape(Cout, 9 * Cmid)
    w2b = jnp.concatenate([w2_flat, bias_block(b2)],
                          axis=1).astype(COMPUTE_DTYPE)      # (Cout, 9*Cmid+8)

    # ---- precomputed edge masks (hoisted out of the kernel body), per-image local coords ----
    lane = jnp.arange(L, dtype=jnp.int32)[None, :] % HW
    hh, ww = lane // W, lane % W
    mask_rows = []
    for dy in (-1, 0, 1):
        for dx in (-1, 0, 1):
            if dy == 0 and dx == 0:
                continue
            valid = ((hh + dy >= 0) & (hh + dy < H) & (ww + dx >= 0) & (ww + dx < W))
            mask_rows.append(valid.astype(COMPUTE_DTYPE))
    masks = jnp.concatenate(mask_rows, axis=0)               # (8, L)

    # ---- input: NCHW -> (C, N*HW) lane-dense slab; pad channels + padded images with zeros ----
    x_t = jnp.transpose(x_nchw, (1, 0, 2, 3)).reshape(Cin, N * HW).astype(COMPUTE_DTYPE)
    x_slab = jnp.pad(x_t, ((0, Cp - Cin), (0, (N_pad - N) * HW)))

    kernel = functools.partial(basic_block_kernel, H=H, W=W, cmid=Cmid)

    out = pl.pallas_call(
        kernel,
        out_shape=jax.ShapeDtypeStruct((Cout, N_pad * HW), f32),
        grid=(G,),
        in_specs=[
            pl.BlockSpec((8, L), lambda i: (0, 0)),                      # edge masks (resident)
            pl.BlockSpec((Cp, L), lambda i: (0, i)),                     # input slab block
            pl.BlockSpec((Cmid + Cout, 9 * Cp + BIAS_ROWS), lambda i: (0, 0)),
            pl.BlockSpec((Cout, 9 * Cmid + BIAS_ROWS), lambda i: (0, 0)),
        ],
        out_specs=pl.BlockSpec((Cout, L), lambda i: (0, i)),
        compiler_params=pltpu.CompilerParams(dimension_semantics=("parallel",)),
    )(masks, x_slab, w1s, w2b)

    out = out.reshape(Cout, N_pad, H, W).transpose(1, 0, 2, 3)[:N]
    return out


def basic_block_reference(x, p, eps=1e-5):
    """Pure-JAX reference in NCHW (eval-mode BatchNorm with running stats)."""
    def bn(y, stats):
        g, b, m, v = stats
        s = g / jnp.sqrt(v + eps)
        return y * s[None, :, None, None] + (b - m * s)[None, :, None, None]

    dn = ("NCHW", "OIHW", "NCHW")
    conv = functools.partial(lax.conv_general_dilated, window_strides=(1, 1),
                             dimension_numbers=dn,
                             precision=lax.Precision.HIGHEST)
    h = jax.nn.relu(bn(conv(x, p["w1"], padding=((1, 1), (1, 1))), p["bn1"]))
    h = bn(conv(h, p["w2"], padding=((1, 1), (1, 1))), p["bn2"])
    sc = bn(conv(x, p["ws"][:, :, None, None], padding=((0, 0), (0, 0))), p["bns"])
    return jax.nn.relu(h + sc)


def make_params(key, cin, cmid, cout):
    ks = jax.random.split(key, 6)
    f = jnp.float32
    w1 = jax.random.normal(ks[0], (cmid, cin, 3, 3), f) / jnp.sqrt(9.0 * cin)
    w2 = jax.random.normal(ks[1], (cout, cmid, 3, 3), f) / jnp.sqrt(9.0 * cmid)
    ws = jax.random.normal(ks[2], (cout, cin), f) / jnp.sqrt(1.0 * cin)

    def bn(k, c):
        ka, kb, km, kv = jax.random.split(k, 4)
        gamma = 1.0 + 0.1 * jax.random.normal(ka, (c,), f)
        beta = 0.1 * jax.random.normal(kb, (c,), f)
        mean = 0.1 * jax.random.normal(km, (c,), f)
        var = jnp.abs(0.5 + 0.1 * jax.random.normal(kv, (c,), f))
        return gamma, beta, mean, var

    return dict(w1=w1, w2=w2, ws=ws,
                bn1=bn(ks[3], cmid), bn2=bn(ks[4], cout), bns=bn(ks[5], cout))


if __name__ == "__main__":
    key = jax.random.PRNGKey(0)
    k_x, k_p = jax.random.split(key)

    N, Cin, Cout, H, W = 2, 4, 8, 16, 16
    x = jax.random.normal(k_x, (N, Cin, H, W), jnp.float32)   # NCHW, like PyTorch
    params = make_params(k_p, Cin, Cout, Cout)

    out = jax.block_until_ready(basic_block_forward(x, params))
    ref = jax.block_until_ready(basic_block_reference(x, params))

    assert out.shape == (N, Cout, H, W)
    err = float(jnp.max(jnp.abs(out - ref)))
    assert err < 1e-3, f"max abs err {err}"

    print("KERNEL_OK")
</pallas_src>

<mosaic_0001>
module attributes {stable_mosaic.version = 11 : i64} {
  func.func @basic_block_kernel(%arg0: i32, %arg1: memref<8x256xf32, #tpu.memory_space<vmem>>, %arg2: memref<8x256xf32, #tpu.memory_space<vmem>>, %arg3: memref<16x80xf32, #tpu.memory_space<vmem>>, %arg4: memref<8x80xf32, #tpu.memory_space<vmem>>, %arg5: memref<8x256xf32, #tpu.memory_space<vmem>>) attributes {dimension_semantics = [#tpu.dimension_semantics<parallel>], iteration_bounds = array<i64: 2>, scalar_prefetch = 0 : i64, scratch_operands = 0 : i64, tpu.core_type = #tpu.core_type<tc>, window_params = [{pipeline_mode = #tpu.pipeline_mode<synchronous>, transform_indices = @transform_0, window_bounds = array<i64: 8, 256>}, {transform_indices = @transform_1, window_bounds = array<i64: 8, 256>}, {pipeline_mode = #tpu.pipeline_mode<synchronous>, transform_indices = @transform_2, window_bounds = array<i64: 16, 80>}, {pipeline_mode = #tpu.pipeline_mode<synchronous>, transform_indices = @transform_3, window_bounds = array<i64: 8, 80>}, {transform_indices = @transform_4, window_bounds = array<i64: 8, 256>}]} {
    %c0 = arith.constant 0 : index
    %c0_0 = arith.constant 0 : index
    %0 = vector.load %arg2[%c0, %c0_0] : memref<8x256xf32, #tpu.memory_space<vmem>>, vector<8x256xf32>
    %c0_1 = arith.constant 0 : index
    %c0_2 = arith.constant 0 : index
    %1 = vector.load %arg1[%c0_1, %c0_2] : memref<8x256xf32, #tpu.memory_space<vmem>>, vector<8x256xf32>
    %cst = arith.constant 1.000000e+00 : f32
    %2 = vector.broadcast %cst : f32 to vector<8x256xf32>
    %c17_i32 = arith.constant 17 : i32
    %3 = tpu.dynamic_rotate %0 by %c17_i32 dim 1 : vector<8x256xf32>, i32 -> vector<8x256xf32>
    %4 = vector.extract_strided_slice %1 {offsets = [0, 0], sizes = [1, 256], strides = [1, 1]} : vector<8x256xf32> to vector<1x256xf32>
    %5 = vector.broadcast %4 : vector<1x256xf32> to vector<8x256xf32>
    %6 = arith.mulf %3, %5 : vector<8x256xf32>
    %c16_i32 = arith.constant 16 : i32
    %7 = tpu.dynamic_rotate %0 by %c16_i32 dim 1 : vector<8x256xf32>, i32 -> vector<8x256xf32>
    %8 = vector.extract_strided_slice %1 {offsets = [1, 0], sizes = [1, 256], strides = [1, 1]} : vector<8x256xf32> to vector<1x256xf32>
    %9 = vector.broadcast %8 : vector<1x256xf32> to vector<8x256xf32>
    %10 = arith.mulf %7, %9 : vector<8x256xf32>
    %c15_i32 = arith.constant 15 : i32
    %11 = tpu.dynamic_rotate %0 by %c15_i32 dim 1 : vector<8x256xf32>, i32 -> vector<8x256xf32>
    %12 = vector.extract_strided_slice %1 {offsets = [2, 0], sizes = [1, 256], strides = [1, 1]} : vector<8x256xf32> to vector<1x256xf32>
    %13 = vector.broadcast %12 : vector<1x256xf32> to vector<8x256xf32>
    %14 = arith.mulf %11, %13 : vector<8x256xf32>
    %c1_i32 = arith.constant 1 : i32
    %15 = tpu.dynamic_rotate %0 by %c1_i32 dim 1 : vector<8x256xf32>, i32 -> vector<8x256xf32>
    %16 = vector.extract_strided_slice %1 {offsets = [3, 0], sizes = [1, 256], strides = [1, 1]} : vector<8x256xf32> to vector<1x256xf32>
    %17 = vector.broadcast %16 : vector<1x256xf32> to vector<8x256xf32>
    %18 = arith.mulf %15, %17 : vector<8x256xf32>
    %c255_i32 = arith.constant 255 : i32
    %19 = tpu.dynamic_rotate %0 by %c255_i32 dim 1 : vector<8x256xf32>, i32 -> vector<8x256xf32>
    %20 = vector.extract_strided_slice %1 {offsets = [4, 0], sizes = [1, 256], strides = [1, 1]} : vector<8x256xf32> to vector<1x256xf32>
    %21 = vector.broadcast %20 : vector<1x256xf32> to vector<8x256xf32>
    %22 = arith.mulf %19, %21 : vector<8x256xf32>
    %c241_i32 = arith.constant 241 : i32
    %23 = tpu.dynamic_rotate %0 by %c241_i32 dim 1 : vector<8x256xf32>, i32 -> vector<8x256xf32>
    %24 = vector.extract_strided_slice %1 {offsets = [5, 0], sizes = [1, 256], strides = [1, 1]} : vector<8x256xf32> to vector<1x256xf32>
    %25 = vector.broadcast %24 : vector<1x256xf32> to vector<8x256xf32>
    %26 = arith.mulf %23, %25 : vector<8x256xf32>
    %c240_i32 = arith.constant 240 : i32
    %27 = tpu.dynamic_rotate %0 by %c240_i32 dim 1 : vector<8x256xf32>, i32 -> vector<8x256xf32>
    %28 = vector.extract_strided_slice %1 {offsets = [6, 0], sizes = [1, 256], strides = [1, 1]} : vector<8x256xf32> to vector<1x256xf32>
    %29 = vector.broadcast %28 : vector<1x256xf32> to vector<8x256xf32>
    %30 = arith.mulf %27, %29 : vector<8x256xf32>
    %c239_i32 = arith.constant 239 : i32
    %31 = tpu.dynamic_rotate %0 by %c239_i32 dim 1 : vector<8x256xf32>, i32 -> vector<8x256xf32>
    %32 = vector.extract_strided_slice %1 {offsets = [7, 0], sizes = [1, 256], strides = [1, 1]} : vector<8x256xf32> to vector<1x256xf32>
    %33 = vector.broadcast %32 : vector<1x256xf32> to vector<8x256xf32>
    %34 = arith.mulf %31, %33 : vector<8x256xf32>
    %35 = tpu.concatenate %6, %10, %14, %18, %0, %22, %26, %30, %34, %2 in 0 : vector<8x256xf32>, vector<8x256xf32>, vector<8x256xf32>, vector<8x256xf32>, vector<8x256xf32>, vector<8x256xf32>, vector<8x256xf32>, vector<8x256xf32>, vector<8x256xf32>, vector<8x256xf32> -> vector<80x256xf32>
    %c0_3 = arith.constant 0 : index
    %c0_4 = arith.constant 0 : index
    %36 = vector.load %arg3[%c0_3, %c0_4] : memref<16x80xf32, #tpu.memory_space<vmem>>, vector<16x80xf32>
    %cst_5 = arith.constant dense<0.000000e+00> : vector<16x256xf32>
    %37 = tpu.matmul %36, %35, %cst_5 {dimension_numbers = #tpu.dot_dimension_numbers<[1], [0], [0], [1], [0, 0, 1, 1], [], []>} : vector<16x80xf32>, vector<80x256xf32>, vector<16x256xf32> -> vector<16x256xf32>
    %38 = vector.extract_strided_slice %37 {offsets = [0, 0], sizes = [8, 256], strides = [1, 1]} : vector<16x256xf32> to vector<8x256xf32>
    %cst_6 = arith.constant 0.000000e+00 : f32
    %39 = vector.broadcast %cst_6 : f32 to vector<8x256xf32>
    %40 = arith.maximumf %38, %39 : vector<8x256xf32>
    %41 = vector.extract_strided_slice %37 {offsets = [8, 0], sizes = [8, 256], strides = [1, 1]} : vector<16x256xf32> to vector<8x256xf32>
    %c17_i32_7 = arith.constant 17 : i32
    %42 = tpu.dynamic_rotate %40 by %c17_i32_7 dim 1 : vector<8x256xf32>, i32 -> vector<8x256xf32>
    %43 = vector.extract_strided_slice %1 {offsets = [0, 0], sizes = [1, 256], strides = [1, 1]} : vector<8x256xf32> to vector<1x256xf32>
    %44 = vector.broadcast %43 : vector<1x256xf32> to vector<8x256xf32>
    %45 = arith.mulf %42, %44 : vector<8x256xf32>
    %c16_i32_8 = arith.constant 16 : i32
    %46 = tpu.dynamic_rotate %40 by %c16_i32_8 dim 1 : vector<8x256xf32>, i32 -> vector<8x256xf32>
    %47 = vector.extract_strided_slice %1 {offsets = [1, 0], sizes = [1, 256], strides = [1, 1]} : vector<8x256xf32> to vector<1x256xf32>
    %48 = vector.broadcast %47 : vector<1x256xf32> to vector<8x256xf32>
    %49 = arith.mulf %46, %48 : vector<8x256xf32>
    %c15_i32_9 = arith.constant 15 : i32
    %50 = tpu.dynamic_rotate %40 by %c15_i32_9 dim 1 : vector<8x256xf32>, i32 -> vector<8x256xf32>
    %51 = vector.extract_strided_slice %1 {offsets = [2, 0], sizes = [1, 256], strides = [1, 1]} : vector<8x256xf32> to vector<1x256xf32>
    %52 = vector.broadcast %51 : vector<1x256xf32> to vector<8x256xf32>
    %53 = arith.mulf %50, %52 : vector<8x256xf32>
    %c1_i32_10 = arith.constant 1 : i32
    %54 = tpu.dynamic_rotate %40 by %c1_i32_10 dim 1 : vector<8x256xf32>, i32 -> vector<8x256xf32>
    %55 = vector.extract_strided_slice %1 {offsets = [3, 0], sizes = [1, 256], strides = [1, 1]} : vector<8x256xf32> to vector<1x256xf32>
    %56 = vector.broadcast %55 : vector<1x256xf32> to vector<8x256xf32>
    %57 = arith.mulf %54, %56 : vector<8x256xf32>
    %c255_i32_11 = arith.constant 255 : i32
    %58 = tpu.dynamic_rotate %40 by %c255_i32_11 dim 1 : vector<8x256xf32>, i32 -> vector<8x256xf32>
    %59 = vector.extract_strided_slice %1 {offsets = [4, 0], sizes = [1, 256], strides = [1, 1]} : vector<8x256xf32> to vector<1x256xf32>
    %60 = vector.broadcast %59 : vector<1x256xf32> to vector<8x256xf32>
    %61 = arith.mulf %58, %60 : vector<8x256xf32>
    %c241_i32_12 = arith.constant 241 : i32
    %62 = tpu.dynamic_rotate %40 by %c241_i32_12 dim 1 : vector<8x256xf32>, i32 -> vector<8x256xf32>
    %63 = vector.extract_strided_slice %1 {offsets = [5, 0], sizes = [1, 256], strides = [1, 1]} : vector<8x256xf32> to vector<1x256xf32>
    %64 = vector.broadcast %63 : vector<1x256xf32> to vector<8x256xf32>
    %65 = arith.mulf %62, %64 : vector<8x256xf32>
    %c240_i32_13 = arith.constant 240 : i32
    %66 = tpu.dynamic_rotate %40 by %c240_i32_13 dim 1 : vector<8x256xf32>, i32 -> vector<8x256xf32>
    %67 = vector.extract_strided_slice %1 {offsets = [6, 0], sizes = [1, 256], strides = [1, 1]} : vector<8x256xf32> to vector<1x256xf32>
    %68 = vector.broadcast %67 : vector<1x256xf32> to vector<8x256xf32>
    %69 = arith.mulf %66, %68 : vector<8x256xf32>
    %c239_i32_14 = arith.constant 239 : i32
    %70 = tpu.dynamic_rotate %40 by %c239_i32_14 dim 1 : vector<8x256xf32>, i32 -> vector<8x256xf32>
    %71 = vector.extract_strided_slice %1 {offsets = [7, 0], sizes = [1, 256], strides = [1, 1]} : vector<8x256xf32> to vector<1x256xf32>
    %72 = vector.broadcast %71 : vector<1x256xf32> to vector<8x256xf32>
    %73 = arith.mulf %70, %72 : vector<8x256xf32>
    %74 = tpu.concatenate %45, %49, %53, %57, %40, %61, %65, %69, %73, %2 in 0 : vector<8x256xf32>, vector<8x256xf32>, vector<8x256xf32>, vector<8x256xf32>, vector<8x256xf32>, vector<8x256xf32>, vector<8x256xf32>, vector<8x256xf32>, vector<8x256xf32>, vector<8x256xf32> -> vector<80x256xf32>
    %c0_15 = arith.constant 0 : index
    %c0_16 = arith.constant 0 : index
    %75 = vector.load %arg4[%c0_15, %c0_16] : memref<8x80xf32, #tpu.memory_space<vmem>>, vector<8x80xf32>
    %cst_17 = arith.constant dense<0.000000e+00> : vector<8x256xf32>
    %76 = tpu.matmul %75, %74, %cst_17 {dimension_numbers = #tpu.dot_dimension_numbers<[1], [0], [0], [1], [0, 0, 1, 1], [], []>} : vector<8x80xf32>, vector<80x256xf32>, vector<8x256xf32> -> vector<8x256xf32>
    %77 = arith.addf %76, %41 : vector<8x256xf32>
    %cst_18 = arith.constant 0.000000e+00 : f32
    %78 = vector.broadcast %cst_18 : f32 to vector<8x256xf32>
    %79 = arith.maximumf %77, %78 : vector<8x256xf32>
    %c0_19 = arith.constant 0 : index
    %c0_20 = arith.constant 0 : index
    %80 = vector.load %arg5[%c0_19, %c0_20] : memref<8x256xf32, #tpu.memory_space<vmem>>, vector<8x256xf32>
    tpu.vector_store %arg5[%c0_19, %c0_20], %79 {strides = array<i32>} : memref<8x256xf32, #tpu.memory_space<vmem>>, vector<8x256xf32>,
    return
  }
  func.func @transform_0(%arg0: i32) -> (i32, i32) {
    %c0_i32 = arith.constant 0 : i32
    %c0_i32_0 = arith.constant 0 : i32
    %c0_i32_1 = arith.constant 0 : i32
    return %c0_i32, %c0_i32_0 : i32, i32
  }
  func.func @transform_1(%arg0: i32) -> (i32, i32) {
    %c0_i32 = arith.constant 0 : i32
    %c0_i32_0 = arith.constant 0 : i32
    return %c0_i32, %arg0 : i32, i32
  }
  func.func @transform_2(%arg0: i32) -> (i32, i32) {
    %c0_i32 = arith.constant 0 : i32
    %c0_i32_0 = arith.constant 0 : i32
    %c0_i32_1 = arith.constant 0 : i32
    return %c0_i32, %c0_i32_0 : i32, i32
  }
  func.func @transform_3(%arg0: i32) -> (i32, i32) {
    %c0_i32 = arith.constant 0 : i32
    %c0_i32_0 = arith.constant 0 : i32
    %c0_i32_1 = arith.constant 0 : i32
    return %c0_i32, %c0_i32_0 : i32, i32
  }
  func.func @transform_4(%arg0: i32) -> (i32, i32) {
    %c0_i32 = arith.constant 0 : i32
    %c0_i32_0 = arith.constant 0 : i32
    return %c0_i32, %arg0 : i32, i32
  }
}

</mosaic_0001>

<llo_original>
// kernel: tpu_custom_call.1
$region0: #{tpu_custom_call.1}
  #allocation0 [shape = 'u32[]', space=smem, size = 0x4, offset = 0x4, fixed_abs, tag = 'smem constant byte address 0x4 - core index']
  #allocation1 [shape = 'u32[72,128]{1,0:T(1,128)}', space=vmem, size = 0x9000, scoped, tag = 'internal scratch']
  %s0 = inlined_call_operand.hbm [shape: f32[8,256], index: 0, kind: input, shape index: {}]
  %s1 = inlined_call_operand.hbm [shape: f32[8,512], index: 1, kind: input, shape index: {}]
  %s2 = inlined_call_operand.hbm [shape: f32[16,80], index: 2, kind: input, shape index: {}]
  %s3 = inlined_call_operand.hbm [shape: f32[8,80], index: 3, kind: input, shape index: {}]
  %s4 = inlined_call_operand.hbm [shape: f32[8,512], index: 4, kind: output, shape index: {}]
  %s5 = sld [smem:[#allocation0]]
  $region65: #{tpu_custom_call.1} parent=0
    _
  %s7 = ssub.s32 1, %s5
  %s8 = scalar_select 0, %s7, %s5
  $region1: #{tpu_custom_call.1} parent=0
    #allocation2 [shape = 'u8[8192]{0}', space=vmem, size = 0x2000, scoped, tag = 'input window, operand 0, single buffered']
    #allocation3 [shape = 's32[2]{0}', space=sflag, size = 0x8, scoped, tag = 'scoped memory for tpu_custom_call.1']
    #allocation4 [shape = 's32[2]{0}', space=sflag, size = 0x8, scoped, tag = 'scoped memory for tpu_custom_call.1']
    #allocation5 [shape = 'u8[16384]{0}', space=vmem, size = 0x4000, scoped, tag = 'input window, operand 1']
    #allocation6 [shape = 's32[2]{0}', space=sflag, size = 0x8, scoped, tag = 'scoped memory for tpu_custom_call.1']
    #allocation7 [shape = 'u8[8192]{0}', space=vmem, size = 0x2000, scoped, tag = 'input window, operand 2, single buffered']
    #allocation8 [shape = 'u8[4096]{0}', space=vmem, size = 0x1000, scoped, tag = 'input window, operand 3, single buffered']
    #allocation9 [shape = 's32[1]{0}', space=sflag, size = 0x4, scoped, tag = 'scoped memory for tpu_custom_call.1']
    #allocation10 [shape = 'u8[16384]{0}', space=vmem, size = 0x4000, scoped, tag = 'output window, operand 0']
    %9 = vsyncpa [#allocation3], 0
    %10 = vsyncpa [#allocation6], 0
    %s11 = scalar_lea.sflag [#allocation6], 1
    %12 = vsyncpa %s11, 0
    %13 = vsyncpa [#allocation9], 0
    %14 = vsyncpa [#allocation4], 0
    %s15 = scalar_lea.sflag [#allocation4], 1
    %16 = vsyncpa %s15, 0
    loop: start=0, step=1, limit=4
    $region2: #{tpu_custom_call.1} parent=1 // loop_pre_header
      _
    $region3: #{tpu_custom_call.1} parent=1 // loop_header
      %s18 = sphi 0, %s22
      %p19 = scmp.ge.s32.totalorder %s18, 4
      %s26 = sphi 0, %s26
      %s28 = sphi 0, %s26
      %s29 = sphi 0, %s28
      %s43 = sphi 0, %s29
      %s49 = sphi 0, %s51
      %s52 = sphi 0, %s49
      %s53 = sphi 0, %s52
      %s69 = sphi 0, %s53
      %s73 = sphi 0, %s73
      %s75 = sphi 0, %s73
      %s76 = sphi 0, %s75
      %s90 = sphi 0, %s76
      %s94 = sphi 0, %s94
      %s96 = sphi 0, %s94
      %s97 = sphi 0, %s96
      %s111 = sphi 0, %s97
      %s117 = sphi 0, %s119
      %s120 = sphi 0, %s117
      %s121 = sphi 0, %s120
      %s137 = sphi 0, %s121
    $region4: #{tpu_custom_call.1} parent=1 // loop_header_branch
      %21 = sbr.rel (%p19) target = $region8
    $region5: #{tpu_custom_call.1} parent=1 // loop_body
      %s23 = ssub.s32 %s18, 1
      %s24 = ssub.s32 %s18, 2
      %s25 = sadd.s32 %s18, 1
      %s27 = sadd.s32 %s26, 1
      %p30 = scmp.eq.s32.totalorder %s18, 1
      %p31 = scmp.ne.s32.totalorder %s26, %s28
      %p32 = scmp.eq.s32.totalorder %s18, 0
      %p33 = por %p31, %p32
      %p34 = scmp.ne.s32.totalorder %s26, %s28
      %p35 = scmp.eq.s32.totalorder %s23, 1
      %p36 = por %p34, %p35
      %p37 = scmp.ne.s32.totalorder %s28, %s29
      %p38 = scmp.eq.s32.totalorder %s23, 0
      %p39 = por %p37, %p38
      %p40 = scmp.ne.s32.totalorder %s28, %s29
      %p41 = scmp.eq.s32.totalorder %s24, 1
      %p42 = por %p40, %p41
      %p44 = scmp.ne.s32.totalorder %s29, %s43
      %p45 = scmp.eq.s32.totalorder %s24, 0
      %p46 = por %p44, %p45
      %s47 = ssub.s32 %s18, %s25
      %p48 = scmp.eq.s32.totalorder %s47, 0
      %s50 = sadd.s32 %s49, 1
      %s51 = scalar_select %p48, %s49, %s50
      %p54 = pneg %p48
      %p55 = scmp.eq.s32.totalorder %s18, 1
      %p56 = por %p54, %p55
      %p57 = scmp.ne.s32.totalorder %s49, %s52
      %p58 = scmp.eq.s32.totalorder %s18, 0
      %p59 = por %p57, %p58
      %p60 = scmp.ne.s32.totalorder %s49, %s52
      %p61 = scmp.eq.s32.totalorder %s23, 1
      %p62 = por %p60, %p61
      %p63 = scmp.ne.s32.totalorder %s52, %s53
      %p64 = scmp.eq.s32.totalorder %s23, 0
      %p65 = por %p63, %p64
      %p66 = scmp.ne.s32.totalorder %s52, %s53
      %p67 = scmp.eq.s32.totalorder %s24, 1
      %p68 = por %p66, %p67
      %p70 = scmp.ne.s32.totalorder %s53, %s69
      %p71 = scmp.eq.s32.totalorder %s24, 0
      %p72 = por %p70, %p71
      %s74 = sadd.s32 %s73, 1
      %p77 = scmp.eq.s32.totalorder %s18, 1
      %p78 = scmp.ne.s32.totalorder %s73, %s75
      %p79 = scmp.eq.s32.totalorder %s18, 0
      %p80 = por %p78, %p79
      %p81 = scmp.ne.s32.totalorder %s73, %s75
      %p82 = scmp.eq.s32.totalorder %s23, 1
      %p83 = por %p81, %p82
      %p84 = scmp.ne.s32.totalorder %s75, %s76
      %p85 = scmp.eq.s32.totalorder %s23, 0
      %p86 = por %p84, %p85
      %p87 = scmp.ne.s32.totalorder %s75, %s76
      %p88 = scmp.eq.s32.totalorder %s24, 1
      %p89 = por %p87, %p88
      %p91 = scmp.ne.s32.totalorder %s76, %s90
      %p92 = scmp.eq.s32.totalorder %s24, 0
      %p93 = por %p91, %p92
      %s95 = sadd.s32 %s94, 1
      %p98 = scmp.eq.s32.totalorder %s18, 1
      %p99 = scmp.ne.s32.totalorder %s94, %s96
      %p100 = scmp.eq.s32.totalorder %s18, 0
      %p101 = por %p99, %p100
      %p102 = scmp.ne.s32.totalorder %s94, %s96
      %p103 = scmp.eq.s32.totalorder %s23, 1
      %p104 = por %p102, %p103
      %p105 = scmp.ne.s32.totalorder %s96, %s97
      %p106 = scmp.eq.s32.totalorder %s23, 0
      %p107 = por %p105, %p106
      %p108 = scmp.ne.s32.totalorder %s96, %s97
      %p109 = scmp.eq.s32.totalorder %s24, 1
      %p110 = por %p108, %p109
      %p112 = scmp.ne.s32.totalorder %s97, %s111
      %p113 = scmp.eq.s32.totalorder %s24, 0
      %p114 = por %p112, %p113
      %s115 = ssub.s32 %s18, %s25
      %p116 = scmp.eq.s32.totalorder %s115, 0
      %s118 = sadd.s32 %s117, 1
      %s119 = scalar_select %p116, %s117, %s118
      %p122 = pneg %p116
      %p123 = scmp.eq.s32.totalorder %s18, 1
      %p124 = por %p122, %p123
      %p125 = scmp.ne.s32.totalorder %s117, %s120
      %p126 = scmp.eq.s32.totalorder %s18, 0
      %p127 = por %p125, %p126
      %p128 = scmp.ne.s32.totalorder %s117, %s120
      %p129 = scmp.eq.s32.totalorder %s23, 1
      %p130 = por %p128, %p129
      %p131 = scmp.ne.s32.totalorder %s120, %s121
      %p132 = scmp.eq.s32.totalorder %s23, 0
      %p133 = por %p131, %p132
      %p134 = scmp.ne.s32.totalorder %s120, %s121
      %p135 = scmp.eq.s32.totalorder %s24, 1
      %p136 = por %p134, %p135
      %p138 = scmp.ne.s32.totalorder %s121, %s137
      %p139 = scmp.eq.s32.totalorder %s24, 0
      %p140 = por %p138, %p139
      %p141 = scmp.le.s32.totalorder 1, %s18
      %p142 = scmp.lt.s32.totalorder %s18, 3
      %p143 = pnand %p141, %p142
      %p144 = pneg %p143
      // Predicated region
      $region9: #{tpu_custom_call.1} parent=5 // pred_check
        _
      $region10: #{tpu_custom_call.1} parent=5 // pred_check_branch
        %146 = sbr.rel (%p143) target = $region12
      $region11: #{tpu_custom_call.1} parent=5 // pred_region
        %s147 = ssub.s32 %s18, 1
        // Predicated region
        $region13: #{tpu_custom_call.1} parent=11 // pred_check
          %p148 = pneg %p39
        $region14: #{tpu_custom_call.1} parent=11 // pred_check_branch
          %150 = sbr.rel (%p148) target = $region16
        $region15: #{tpu_custom_call.1} parent=11 // pred_region
          %152 = vsyncadd [#allocation3], 0
          %s154 = sshll.u32 %s0, 4
          %s155 = int_to_ptr.hbm [resolvable:$true] %s154
          %s156 = sshll.u32 [#allocation2], 4
          %s157 = int_to_ptr.vmem [resolvable:$true] %s156
          %159 = dma.hbm_to_vmem [thread:$0]  %s155, 256, %s157, [#allocation3]
        $region16: #{tpu_custom_call.1} parent=11 // pred_fallthru
          _
        // Predicated region
        $region17: #{tpu_custom_call.1} parent=11 // pred_check
          %p160 = pneg %p86
        $region18: #{tpu_custom_call.1} parent=11 // pred_check_branch
          %162 = sbr.rel (%p160) target = $region20
        $region19: #{tpu_custom_call.1} parent=11 // pred_region
          %164 = vsyncadd [#allocation6], 0
          %s165 = sshll.u32 %s2, 4
          %s166 = int_to_ptr.hbm [resolvable:$true] %s165
          %s167 = sshll.u32 [#allocation7], 4
          %s168 = int_to_ptr.vmem [resolvable:$true] %s167
          %173 = dma.hbm_to_vmem [thread:$0]  %s166, 256, %s168, [#allocation6], 128, 128, 8
        $region20: #{tpu_custom_call.1} parent=11 // pred_fallthru
          _
        // Predicated region
        $region21: #{tpu_custom_call.1} parent=11 // pred_check
          %p174 = pneg %p107
        $region22: #{tpu_custom_call.1} parent=11 // pred_check_branch
          %176 = sbr.rel (%p174) target = $region24
        $region23: #{tpu_custom_call.1} parent=11 // pred_region
          %178 = vsyncadd [#allocation9], 0
          %s180 = sshll.u32 %s3, 4
          %s181 = int_to_ptr.hbm [resolvable:$true] %s180
          %s182 = sshll.u32 [#allocation8], 4
          %s183 = int_to_ptr.vmem [resolvable:$true] %s182
          %185 = dma.hbm_to_vmem [thread:$0]  %s181, 128, %s183, [#allocation9]
        $region24: #{tpu_custom_call.1} parent=11 // pred_fallthru
          _
      $region12: #{tpu_custom_call.1} parent=5 // pred_fallthru
        _
      %p186 = scmp.lt.s32.totalorder %s18, 2
      // Predicated region
      $region25: #{tpu_custom_call.1} parent=5 // pred_check
        %p187 = pneg %p186
      $region26: #{tpu_custom_call.1} parent=5 // pred_check_branch
        %189 = sbr.rel (%p187) target = $region28
      $region27: #{tpu_custom_call.1} parent=5 // pred_region
        // Predicated region
        $region29: #{tpu_custom_call.1} parent=27 // pred_check
          %p190 = pneg %p59
        $region30: #{tpu_custom_call.1} parent=27 // pred_check_branch
          %192 = sbr.rel (%p190) target = $region32
        $region31: #{tpu_custom_call.1} parent=27 // pred_region
          %s193 = sand.u32 %s18, 1
          %s194 = scalar_lea.sflag [#allocation6], %s193
          %s195 = sand.u32 %s49, 1
          %s196 = smul.addr %s195, 16
          %s197 = scalar_lea.vmem [#allocation5], %s196
          %s198 = smul.u32 2, %s18
          %200 = vsyncadd %s194, 0
          %s201 = smul.addr %s198, 8
          %s202 = scalar_lea.hbm %s1, %s201
          %s204 = sshll.u32 %s202, 4
          %s205 = int_to_ptr.hbm [resolvable:$true] %s204
          %s206 = sshll.u32 %s197, 4
          %s207 = int_to_ptr.vmem [resolvable:$true] %s206
          %209 = dma.hbm_to_vmem [thread:$0]  %s205, 256, %s207, %s194
        $region32: #{tpu_custom_call.1} parent=27 // pred_fallthru
          _
      $region28: #{tpu_custom_call.1} parent=5 // pred_fallthru
        _
      %p210 = scmp.le.s32.totalorder 1, %s18
      %p211 = scmp.lt.s32.totalorder %s18, 3
      %p212 = pnand %p210, %p211
      %p213 = pneg %p212
      // Predicated region
      $region33: #{tpu_custom_call.1} parent=5 // pred_check
        _
      $region34: #{tpu_custom_call.1} parent=5 // pred_check_branch
        %215 = sbr.rel (%p212) target = $region36
      $region35: #{tpu_custom_call.1} parent=5 // pred_region
        %s216 = ssub.s32 %s18, 1
        // Predicated region
        $region37: #{tpu_custom_call.1} parent=35 // pred_check
          %p217 = pneg %p39
        $region38: #{tpu_custom_call.1} parent=35 // pred_check_branch
          %219 = sbr.rel (%p217) target = $region40
        $region39: #{tpu_custom_call.1} parent=35 // pred_region
          %221 = dma.done [#allocation3], 256
        $region40: #{tpu_custom_call.1} parent=35 // pred_fallthru
          _
        %s222 = sand.u32 %s23, 1
        %s223 = scalar_lea.sflag [#allocation6], %s222
        %s224 = sand.u32 %s52, 1
        %s225 = smul.addr %s224, 16
        %s226 = scalar_lea.vmem [#allocation5], %s225
        // Predicated region
        $region41: #{tpu_custom_call.1} parent=35 // pred_check
          %p227 = pneg %p65
        $region42: #{tpu_custom_call.1} parent=35 // pred_check_branch
          %229 = sbr.rel (%p227) target = $region44
        $region43: #{tpu_custom_call.1} parent=35 // pred_region
          %231 = dma.done %s223, 256
        $region44: #{tpu_custom_call.1} parent=35 // pred_fallthru
          _
        // Predicated region
        $region45: #{tpu_custom_call.1} parent=35 // pred_check
          %p232 = pneg %p86
        $region46: #{tpu_custom_call.1} parent=35 // pred_check_branch
          %234 = sbr.rel (%p232) target = $region48
        $region47: #{tpu_custom_call.1} parent=35 // pred_region
          %236 = dma.done [#allocation6], 256
        $region48: #{tpu_custom_call.1} parent=35 // pred_fallthru
          _
        // Predicated region
        $region49: #{tpu_custom_call.1} parent=35 // pred_check
          %p237 = pneg %p107
        $region50: #{tpu_custom_call.1} parent=35 // pred_check_branch
          %239 = sbr.rel (%p237) target = $region52
        $region51: #{tpu_custom_call.1} parent=35 // pred_region
          %241 = dma.done [#allocation9], 128
        $region52: #{tpu_custom_call.1} parent=35 // pred_fallthru
          _
        %p242 = pneg %p39
        %p243 = pneg %p36
        %s244 = sand.u32 %s23, 1
        %s245 = scalar_lea.sflag [#allocation6], %s244
        %s246 = sand.u32 %s52, 1
        %s247 = smul.addr %s246, 16
        %s248 = scalar_lea.vmem [#allocation5], %s247
        %p249 = pneg %p65
        %p250 = pneg %p62
        %p251 = pneg %p86
        %p252 = pneg %p83
        %p253 = pneg %p107
        %p254 = pneg %p104
        %p255 = pneg %p133
        %p256 = pneg %p130
        %s257 = sand.u32 %s120, 1
        %s258 = scalar_lea.sflag [#allocation4], %s257
        %s259 = sand.u32 %s120, 1
        %s260 = smul.addr %s259, 16
        %s261 = scalar_lea.vmem [#allocation10], %s260
        %s262 = smul.u32 2, %s23
        %s263 = smul.u32 2, %s23
        %v264 = vld [vmem:[%s226] sm:$0xff]
        %v265 = vld [vmem:[%s226 + $0x8] sm:$0xff]
        %v266 = vld [vmem:[#allocation2] sm:$0xff]
        %v267 = vld [vmem:[#allocation2 + $0x8] sm:$0xff]
        %268 = vrot.lane.b32.xlu0 %v264, 17
        %v269 = vpop.permute.xlu0 %268
        %270 = vrot.lane.b32.xlu0 %v265, 17
        %v271 = vpop.permute.xlu0 %270
        %v272 = vlaneseq
        %v273 = vand.u32 %v272, 127
        %vm274 = vcmp.lt.s32.totalorder %v273, 17
        %v275 = vsel %vm274, %v269, %v271
        %v276 = vsel %vm274, %v271, %v269
        %v277 = vperm.slane %v266, 0
        %v278 = vperm.slane %v267, 0
        %v279 = vmul.f32 %v276, %v277
        %v280 = vmul.f32 %v275, %v278
        %281 = vrot.lane.b32.xlu0 %v264, 16
        %v282 = vpop.permute.xlu0 %281
        %283 = vrot.lane.b32.xlu0 %v265, 16
        %v284 = vpop.permute.xlu0 %283
        %vm285 = vcmp.lt.s32.totalorder %v273, 16
        %v286 = vsel %vm285, %v282, %v284
        %v287 = vsel %vm285, %v284, %v282
        %v288 = vperm.slane %v266, 1
        %v289 = vperm.slane %v267, 1
        %v290 = vmul.f32 %v287, %v288
        %v291 = vmul.f32 %v286, %v289
        %292 = vrot.lane.b32.xlu0 %v264, 15
        %v293 = vpop.permute.xlu0 %292
        %294 = vrot.lane.b32.xlu0 %v265, 15
        %v295 = vpop.permute.xlu0 %294
        %vm296 = vcmp.lt.s32.totalorder %v273, 15
        %v297 = vsel %vm296, %v293, %v295
        %v298 = vsel %vm296, %v295, %v293
        %v299 = vperm.slane %v266, 2
        %v300 = vperm.slane %v267, 2
        %v301 = vmul.f32 %v298, %v299
        %v302 = vmul.f32 %v297, %v300
        %303 = vrot.lane.b32.xlu0 %v264, 1
        %v304 = vpop.permute.xlu0 %303
        %305 = vrot.lane.b32.xlu0 %v265, 1
        %v306 = vpop.permute.xlu0 %305
        %vm307 = vcmp.lt.s32.totalorder %v273, 1
        %v308 = vsel %vm307, %v304, %v306
        %v309 = vsel %vm307, %v306, %v304
        %v310 = vperm.slane %v266, 3
        %v311 = vperm.slane %v267, 3
        %v312 = vmul.f32 %v309, %v310
        %v313 = vmul.f32 %v308, %v311
        %314 = vrot.lane.b32.xlu0 %v264, 127
        %v315 = vpop.permute.xlu0 %314
        %316 = vrot.lane.b32.xlu0 %v265, 127
        %v317 = vpop.permute.xlu0 %316
        %vm318 = vcmp.lt.s32.totalorder %v273, 127
        %v319 = vsel %vm318, %v315, %v317
        %v320 = vsel %vm318, %v317, %v315
        %v321 = vperm.slane %v266, 4
        %v322 = vperm.slane %v267, 4
        %v323 = vmul.f32 %v319, %v321
        %v324 = vmul.f32 %v320, %v322
        %325 = vrot.lane.b32.xlu0 %v264, 113
        %v326 = vpop.permute.xlu0 %325
        %327 = vrot.lane.b32.xlu0 %v265, 113
        %v328 = vpop.permute.xlu0 %327
        %vm329 = vcmp.lt.s32.totalorder %v273, 113
        %v330 = vsel %vm329, %v326, %v328
        %v331 = vsel %vm329, %v328, %v326
        %v332 = vperm.slane %v266, 5
        %v333 = vperm.slane %v267, 5
        %v334 = vmul.f32 %v330, %v332
        %v335 = vmul.f32 %v331, %v333
        %336 = vrot.lane.b32.xlu0 %v264, 112
        %v337 = vpop.permute.xlu0 %336
        %338 = vrot.lane.b32.xlu0 %v265, 112
        %v339 = vpop.permute.xlu0 %338
        %vm340 = vcmp.lt.s32.totalorder %v273, 112
        %v341 = vsel %vm340, %v337, %v339
        %v342 = vsel %vm340, %v339, %v337
        %v343 = vperm.slane %v266, 6
        %v344 = vperm.slane %v267, 6
        %v345 = vmul.f32 %v341, %v343
        %v346 = vmul.f32 %v342, %v344
        %347 = vrot.lane.b32.xlu0 %v264, 111
        %v348 = vpop.permute.xlu0 %347
        %349 = vrot.lane.b32.xlu0 %v265, 111
        %v350 = vpop.permute.xlu0 %349
        %vm351 = vcmp.lt.s32.totalorder %v273, 111
        %v352 = vsel %vm351, %v348, %v350
        %v353 = vsel %vm351, %v350, %v348
        %v354 = vperm.slane %v266, 7
        %v355 = vperm.slane %v267, 7
        %v356 = vmul.f32 %v352, %v354
        %v357 = vmul.f32 %v353, %v355
        %v358 = vld [vmem:[#allocation7] sm:$0xff]
        %v359 = vld [vmem:[#allocation7 + $0x8] sm:$0xff]
        %vm360 = vcmask 654336
        %v362 = vsel %vm360, %v358, 0
        %v365 = vsel %vm360, %v359, 0
        %367 = vmatpush.msra.mxu0 0.0
        %368 = vmatpush.msra.mxu0 0.0
        %369 = vmatpush.msra.mxu0 0.0
        %370 = vmatpush.msra.mxu0 0.0
        %371 = vmatpush.msra.mxu0 0.0
        %372 = vmatpush.msra.mxu0 0.0
        %373 = vmatpush.msra.mxu0 1.0
        %374 = vmatpush.msra.mxu0 %v356
        %375 = vmatpush.msra.mxu0 %v345
        %376 = vmatpush.msra.mxu0 %v334
        %377 = vmatpush.msra.mxu0 %v323
        %378 = vmatpush.msra.mxu0 %v264
        %379 = vmatpush.msra.mxu0 %v312
        %380 = vmatpush.msra.mxu0 %v301
        %381 = vmatpush.msra.mxu0 %v290
        %382 = vmatpush.msra.mxu0 %v279
        %383 = vmatmul.f32.gmra.mxu0 %v362
        %v384 = vpop.f32.mrf.mxu0
        %v385 = vadd.f32 0.0, %v384
        %386 = vmatmul.f32.gmra.mxu0 %v365
        %v387 = vpop.f32.mrf.mxu0
        %v388 = vadd.f32 0.0, %v387
        %389 = vdwg.mxu0
        %390 = vmatpush.msra.mxu0 0.0
        %391 = vmatpush.msra.mxu0 0.0
        %392 = vmatpush.msra.mxu0 0.0
        %393 = vmatpush.msra.mxu0 0.0
        %394 = vmatpush.msra.mxu0 0.0
        %395 = vmatpush.msra.mxu0 0.0
        %396 = vmatpush.msra.mxu0 1.0
        %397 = vmatpush.msra.mxu0 %v357
        %398 = vmatpush.msra.mxu0 %v346
        %399 = vmatpush.msra.mxu0 %v335
        %400 = vmatpush.msra.mxu0 %v324
        %401 = vmatpush.msra.mxu0 %v265
        %402 = vmatpush.msra.mxu0 %v313
        %403 = vmatpush.msra.mxu0 %v302
        %404 = vmatpush.msra.mxu0 %v291
        %405 = vmatpush.msra.mxu0 %v280
        %406 = vmatmul.f32.gmra.mxu0 %v362
        %v407 = vpop.f32.mrf.mxu0
        %v408 = vadd.f32 0.0, %v407
        %409 = vmatmul.f32.gmra.mxu0 %v365
        %v410 = vpop.f32.mrf.mxu0
        %v411 = vadd.f32 0.0, %v410
        %412 = vdwg.mxu0
        %v413 = vmax.f32 %v385, 0.0
        %v414 = vmax.f32 %v408, 0.0
        %415 = vrot.lane.b32.xlu0 %v413, 17
        %v416 = vpop.permute.xlu0 %415
        %417 = vrot.lane.b32.xlu0 %v414, 17
        %v418 = vpop.permute.xlu0 %417
        %v419 = vsel %vm274, %v416, %v418
        %v420 = vsel %vm274, %v418, %v416
        %v421 = vmul.f32 %v420, %v277
        %v422 = vmul.f32 %v419, %v278
        %423 = vrot.lane.b32.xlu0 %v413, 16
        %v424 = vpop.permute.xlu0 %423
        %425 = vrot.lane.b32.xlu0 %v414, 16
        %v426 = vpop.permute.xlu0 %425
        %v427 = vsel %vm285, %v424, %v426
        %v428 = vsel %vm285, %v426, %v424
        %v429 = vmul.f32 %v428, %v288
        %v430 = vmul.f32 %v427, %v289
        %431 = vrot.lane.b32.xlu0 %v413, 15
        %v432 = vpop.permute.xlu0 %431
        %433 = vrot.lane.b32.xlu0 %v414, 15
        %v434 = vpop.permute.xlu0 %433
        %v435 = vsel %vm296, %v432, %v434
        %v436 = vsel %vm296, %v434, %v432
        %v437 = vmul.f32 %v436, %v299
        %v438 = vmul.f32 %v435, %v300
        %439 = vrot.lane.b32.xlu0 %v413, 1
        %v440 = vpop.permute.xlu0 %439
        %441 = vrot.lane.b32.xlu0 %v414, 1
        %v442 = vpop.permute.xlu0 %441
        %v443 = vsel %vm307, %v440, %v442
        %v444 = vsel %vm307, %v442, %v440
        %v445 = vmul.f32 %v444, %v310
        %v446 = vmul.f32 %v443, %v311
        %447 = vrot.lane.b32.xlu0 %v413, 127
        %v448 = vpop.permute.xlu0 %447
        %449 = vrot.lane.b32.xlu0 %v414, 127
        %v450 = vpop.permute.xlu0 %449
        %v451 = vsel %vm318, %v448, %v450
        %v452 = vsel %vm318, %v450, %v448
        %v453 = vmul.f32 %v451, %v321
        %v454 = vmul.f32 %v452, %v322
        %455 = vrot.lane.b32.xlu0 %v413, 113
        %v456 = vpop.permute.xlu0 %455
        %457 = vrot.lane.b32.xlu0 %v414, 113
        %v458 = vpop.permute.xlu0 %457
        %v459 = vsel %vm329, %v456, %v458
        %v460 = vsel %vm329, %v458, %v456
        %v461 = vmul.f32 %v459, %v332
        %v462 = vmul.f32 %v460, %v333
        %463 = vrot.lane.b32.xlu0 %v413, 112
        %v464 = vpop.permute.xlu0 %463
        %465 = vrot.lane.b32.xlu0 %v414, 112
        %v466 = vpop.permute.xlu0 %465
        %v467 = vsel %vm340, %v464, %v466
        %v468 = vsel %vm340, %v466, %v464
        %v469 = vmul.f32 %v467, %v343
        %v470 = vmul.f32 %v468, %v344
        %471 = vrot.lane.b32.xlu0 %v413, 111
        %v472 = vpop.permute.xlu0 %471
        %473 = vrot.lane.b32.xlu0 %v414, 111
        %v474 = vpop.permute.xlu0 %473
        %v475 = vsel %vm351, %v472, %v474
        %v476 = vsel %vm351, %v474, %v472
        %v477 = vmul.f32 %v475, %v354
        %v478 = vmul.f32 %v476, %v355
        %v479 = vld [vmem:[#allocation8] sm:$0xff]
        %v481 = vsel %vm360, %v479, 0
        %483 = vmatpush.msra.mxu0 0.0
        %484 = vmatpush.msra.mxu0 0.0
        %485 = vmatpush.msra.mxu0 0.0
        %486 = vmatpush.msra.mxu0 0.0
        %487 = vmatpush.msra.mxu0 0.0
        %488 = vmatpush.msra.mxu0 0.0
        %489 = vmatpush.msra.mxu0 1.0
        %490 = vmatpush.msra.mxu0 %v477
        %491 = vmatpush.msra.mxu0 %v469
        %492 = vmatpush.msra.mxu0 %v461
        %493 = vmatpush.msra.mxu0 %v453
        %494 = vmatpush.msra.mxu0 %v413
        %495 = vmatpush.msra.mxu0 %v445
        %496 = vmatpush.msra.mxu0 %v437
        %497 = vmatpush.msra.mxu0 %v429
        %498 = vmatpush.msra.mxu0 %v421
        %499 = vmatmul.f32.gmra.mxu0 %v481
        %v500 = vpop.f32.mrf.mxu0
        %v501 = vadd.f32 %v388, %v500
        %502 = vdwg.mxu0
        %503 = vmatpush.msra.mxu0 0.0
        %504 = vmatpush.msra.mxu0 0.0
        %505 = vmatpush.msra.mxu0 0.0
        %506 = vmatpush.msra.mxu0 0.0
        %507 = vmatpush.msra.mxu0 0.0
        %508 = vmatpush.msra.mxu0 0.0
        %509 = vmatpush.msra.mxu0 1.0
        %510 = vmatpush.msra.mxu0 %v478
        %511 = vmatpush.msra.mxu0 %v470
        %512 = vmatpush.msra.mxu0 %v462
        %513 = vmatpush.msra.mxu0 %v454
        %514 = vmatpush.msra.mxu0 %v414
        %515 = vmatpush.msra.mxu0 %v446
        %516 = vmatpush.msra.mxu0 %v438
        %517 = vmatpush.msra.mxu0 %v430
        %518 = vmatpush.msra.mxu0 %v422
        %519 = vmatmul.f32.gmra.mxu0 %v481
        %v520 = vpop.f32.mrf.mxu0
        %v521 = vadd.f32 %v411, %v520
        %522 = vdwg.mxu0
        %v523 = vmax.f32 %v501, 0.0
        %v524 = vmax.f32 %v521, 0.0
        %525 = vst [vmem:[%s261] sm:$0xff] %v523
        %526 = vst [vmem:[%s261 + $0x8] sm:$0xff] %v524
        %s527 = sand.u32 %s120, 1
        %s528 = scalar_lea.sflag [#allocation4], %s527
        %s529 = sand.u32 %s120, 1
        %s530 = smul.addr %s529, 16
        %s531 = scalar_lea.vmem [#allocation10], %s530
        // Predicated region
        $region53: #{tpu_custom_call.1} parent=35 // pred_check
          %p532 = pneg %p130
        $region54: #{tpu_custom_call.1} parent=35 // pred_check_branch
          %534 = sbr.rel (%p532) target = $region56
        $region55: #{tpu_custom_call.1} parent=35 // pred_region
          %s535 = smul.u32 2, %s23
          %537 = vsyncadd %s528, 0
          %s538 = smul.addr %s535, 8
          %s539 = scalar_lea.hbm %s4, %s538
          %s541 = sshll.u32 %s531, 4
          %s542 = int_to_ptr.vmem [resolvable:$true] %s541
          %s543 = sshll.u32 %s539, 4
          %s544 = int_to_ptr.hbm [resolvable:$true] %s543
          %546 = dma.vmem_to_hbm [thread:$0]  %s542, 256, %s544, %s528
        $region56: #{tpu_custom_call.1} parent=35 // pred_fallthru
          _
      $region36: #{tpu_custom_call.1} parent=5 // pred_fallthru
        _
      %p547 = scmp.le.s32.totalorder 2, %s18
      // Predicated region
      $region57: #{tpu_custom_call.1} parent=5 // pred_check
        %p548 = pneg %p547
      $region58: #{tpu_custom_call.1} parent=5 // pred_check_branch
        %550 = sbr.rel (%p548) target = $region60
      $region59: #{tpu_custom_call.1} parent=5 // pred_region
        %s551 = ssub.s32 %s18, 2
        // Predicated region
        $region61: #{tpu_custom_call.1} parent=59 // pred_check
          %p552 = pneg %p136
        $region62: #{tpu_custom_call.1} parent=59 // pred_check_branch
          %554 = sbr.rel (%p552) target = $region64
        $region63: #{tpu_custom_call.1} parent=59 // pred_region
          %s555 = sand.u32 %s121, 1
          %s556 = scalar_lea.sflag [#allocation4], %s555
          %s557 = sand.u32 %s121, 1
          %s558 = smul.addr %s557, 16
          %s559 = scalar_lea.vmem [#allocation10], %s558
          %561 = dma.done %s556, 256
        $region64: #{tpu_custom_call.1} parent=59 // pred_fallthru
          _
      $region60: #{tpu_custom_call.1} parent=5 // pred_fallthru
        _
    $region6: #{tpu_custom_call.1} parent=1 // loop_footer
      %s22 = sadd.s32 1, %s18
    $region7: #{tpu_custom_call.1} parent=1 // loop_footer_branch
      %17 = sbr.rel target = $region3
    $region8: #{tpu_custom_call.1} parent=1 // loop_exit
      _
    %562 = vsyncpa [#allocation3], 1
    %s563 = scalar_lea.sflag [#allocation3], 1
    %564 = vsyncpa %s563, 1
    %565 = vsyncpa [#allocation6], 1
    %s566 = scalar_lea.sflag [#allocation6], 1
    %567 = vsyncpa %s566, 1
    %568 = vsyncpa [#allocation9], 1
    %569 = vsyncpa [#allocation4], 1
    %s570 = scalar_lea.sflag [#allocation4], 1
    %571 = vsyncpa %s570, 1

</llo_original>
